<compile_context>
chip_gen: v7x
topology: tpu7x:2x2x1
jax: 0.10.0
libtpu: 0.0.40
codegen_flags: <defaults>
</compile_context>

<pallas_src>
import functools

import jax
import jax.numpy as jnp
from jax import lax
from jax.experimental import pallas as pl
from jax.experimental.pallas import tpu as pltpu


# dot_general dimension numbers for layer 1:
#   _NT: x arrives batch-major (T, 13)      -> contract feature dims of both operands.
#   _NN: x arrives feature-major (13, T)    -> standard matmul.
_NT_DIMS = (((1,), (1,)), ((), ()))
_NN_DIMS = (((1,), (0,)), ((), ()))


def _mlp_kernel(x_ref, w1_ref, b1_ref, w2_ref, b2_ref, w3_ref, b3_ref, o_ref, *,
                x_dim_numbers):
    # Layer 1 on the MXU; result is feature-major (64, T) so everything downstream is
    # lane-dense.  x_ref/w1_ref share a dtype (bf16 feeds the MXU natively), accumulate f32.
    h1 = lax.dot_general(w1_ref[...], x_ref[...], x_dim_numbers,
                         preferred_element_type=jnp.float32)           # (64, T)
    h1 = jnp.maximum(h1 + b1_ref[...], 0.0)                            # bias (64,1), ReLU

    # Layer 2: (32, 64) @ (64, T), f32 accumulate.
    h2 = jnp.dot(w2_ref[...], h1, preferred_element_type=jnp.float32)  # (32, T)
    h2 = jnp.maximum(h2 + b2_ref[...], 0.0)

    # Layer 3 (out_features = 1): (1, 32) @ (32, T) on the MXU -> lane-dense (1, T) row.
    out = jnp.dot(w3_ref[...], h2, preferred_element_type=jnp.float32) + b3_ref[...]
    o_ref[...] = out.astype(o_ref.dtype)


def _choose_batch_tile(B, requested, max_tile=4096):
    """Pick the batch tile T (number of rows / lanes handled per grid step)."""
    if requested is not None:
        T = min(int(requested), B)
    elif B <= max_tile:
        T = B                               # one block == full array: no divisibility constraints
    else:
        tiles = -(-B // max_tile)           # ceil
        if tiles % 2 == 1:                  # even grid keeps both v7x TensorCores busy
            tiles += 1
        per = -(-B // tiles)
        T = -(-per // 128) * 128            # lane-dense (1, T) output blocks need T % 128 == 0
    if T < B and T % 128 != 0:
        raise ValueError("batch_tile must be a multiple of 128 when smaller than the batch")
    return T


def tab_transformer_forward(x, params, *, batch_tile=None, feature_major_input=False):
    """Forward pass.  x: (B, 13) (or (13, B) with feature_major_input=True) -> (B, 1).

    params are PyTorch nn.Linear layout: W (out_features, in_features), b (out_features,).
    x may be f32 or bf16; bf16 is fed to the MXU natively (math still accumulates in f32).
    """
    w1, b1, w2, b2, w3, b3 = params
    if feature_major_input:
        d_in, B = x.shape
    else:
        B, d_in = x.shape
    assert d_in == 13, d_in

    T = _choose_batch_tile(B, batch_tile)
    num_tiles = pl.cdiv(B, T)               # last block may be partial; Pallas masks writeback

    x_dt = x.dtype
    # w1 matches x's dtype (native bf16 MXU path when x is bf16); everything else stays f32.
    w1c = jnp.asarray(w1).astype(x_dt)                       # (64, 13)
    w2c = jnp.asarray(w2).astype(jnp.float32)                # (32, 64)
    w3c = jnp.asarray(w3).reshape(1, -1).astype(jnp.float32) # (1, 32)
    b1c = jnp.asarray(b1).reshape(-1, 1).astype(jnp.float32) # (64, 1)
    b2c = jnp.asarray(b2).reshape(-1, 1).astype(jnp.float32) # (32, 1)
    b3c = jnp.asarray(b3).reshape(1, 1).astype(jnp.float32)  # (1, 1)

    if feature_major_input:
        x_spec = pl.BlockSpec((13, T), lambda i: (0, i))     # (13, T) tile, batch on lanes
        dims = _NN_DIMS
    else:
        x_spec = pl.BlockSpec((T, 13), lambda i: (i, 0))     # torch-layout (T, 13) tile
        dims = _NT_DIMS

    # Constant index_map -> DMA'd once, resident in VMEM for every grid step.
    const = lambda a: pl.BlockSpec(a.shape, lambda i: (0, 0))

    # VMEM estimate (lane-padded x block double-buffered + output buffers + h1/h2/xT temps).
    # Only raise the scoped-VMEM limit when a user-requested tile actually needs it
    # (v5e's default is 16 MiB); the auto-chosen tiles stay well under the default everywhere.
    itemsize = jnp.dtype(x_dt).itemsize
    vmem_est = (2 * T * 128 * itemsize          # x blocks (13 lanes padded to 128)
                + 2 * 8 * T * 4                 # (1, T) output blocks (padded to 8 sublanes)
                + (64 + 32 + 16) * T * 4        # h1, h2, transposed-x temporaries
                + (1 << 20))                    # weights + slack
    cp_kwargs = dict(dimension_semantics=("parallel",))
    if vmem_est > 16 * 2**20:
        cp_kwargs["vmem_limit_bytes"] = int(min(vmem_est + (8 << 20), 64 * 2**20))

    out = pl.pallas_call(
        functools.partial(_mlp_kernel, x_dim_numbers=dims),
        out_shape=jax.ShapeDtypeStruct((1, B), jnp.float32),
        grid_spec=pltpu.PrefetchScalarGridSpec(
            num_scalar_prefetch=0,
            grid=(num_tiles,),
            in_specs=[x_spec,
                      const(w1c), const(b1c),
                      const(w2c), const(b2c),
                      const(w3c), const(b3c)],
            out_specs=pl.BlockSpec((1, T), lambda i: (0, i)),   # lane-dense output row
        ),
        compiler_params=pltpu.CompilerParams(**cp_kwargs),
    )(x, w1c, b1c, w2c, b2c, w3c, b3c)

    return out.reshape(B, 1)


def init_params(key):
    """PyTorch nn.Linear-style init: W (out, in), b (out,), uniform(+-1/sqrt(fan_in))."""
    dims = [(13, 64), (64, 32), (32, 1)]
    params = []
    keys = jax.random.split(key, 2 * len(dims))
    for li, (fan_in, fan_out) in enumerate(dims):
        bound = 1.0 / jnp.sqrt(jnp.float32(fan_in))
        w = jax.random.uniform(keys[2 * li], (fan_out, fan_in),
                               minval=-bound, maxval=bound, dtype=jnp.float32)
        b = jax.random.uniform(keys[2 * li + 1], (fan_out,),
                               minval=-bound, maxval=bound, dtype=jnp.float32)
        params += [w, b]
    return tuple(params)


def reference_forward(x, params):
    w1, b1, w2, b2, w3, b3 = params
    h1 = jnp.maximum(x @ w1.T + b1, 0.0)
    h2 = jnp.maximum(h1 @ w2.T + b2, 0.0)
    return h2 @ w3.T + b3


if __name__ == "__main__":
    key = jax.random.PRNGKey(0)
    k_x, k_p = jax.random.split(key)

    B = 300  # small, and deliberately not a multiple of 8/128
    x = jax.random.normal(k_x, (B, 13), dtype=jnp.float32)
    params = init_params(k_p)
    ref = reference_forward(x, params)

    # Default path: torch-layout (B, 13) f32 input, auto tile -> single full-batch block.
    out = jax.block_until_ready(tab_transformer_forward(x, params))
    assert out.shape == (B, 1), out.shape
    assert jnp.allclose(out, ref, atol=5e-4, rtol=5e-4), "f32 kernel mismatch vs reference"

    # Multi-tile path with a partial last block: exercises the grid + masked output writeback.
    out_t = jax.block_until_ready(tab_transformer_forward(x, params, batch_tile=128))
    assert jnp.allclose(out_t, ref, atol=5e-4, rtol=5e-4), "multi-tile kernel mismatch"

    # Feature-major upstream storage (x already (13, B)): zero relayout anywhere.
    out_fm = jax.block_until_ready(
        tab_transformer_forward(x.T, params, feature_major_input=True))
    assert jnp.allclose(out_fm, ref, atol=5e-4, rtol=5e-4), "feature-major kernel mismatch"

    # bf16 x storage: fed natively to the MXU (w1 cast to bf16); accumulation stays f32.
    out_bf = jax.block_until_ready(tab_transformer_forward(x.astype(jnp.bfloat16), params))
    assert jnp.allclose(out_bf, ref, atol=5e-2, rtol=5e-2), "bf16-storage kernel mismatch"

    print("KERNEL_OK")
</pallas_src>

<mosaic_0001>
module attributes {stable_mosaic.version = 11 : i64} {
  func.func @_mlp_kernel(%arg0: i32, %arg1: memref<300x13xf32, #tpu.memory_space<vmem>>, %arg2: memref<64x13xf32, #tpu.memory_space<vmem>>, %arg3: memref<64x1xf32, #tpu.memory_space<vmem>>, %arg4: memref<32x64xf32, #tpu.memory_space<vmem>>, %arg5: memref<32x1xf32, #tpu.memory_space<vmem>>, %arg6: memref<1x32xf32, #tpu.memory_space<vmem>>, %arg7: memref<1x1xf32, #tpu.memory_space<vmem>>, %arg8: memref<1x300xf32, #tpu.memory_space<vmem>>) attributes {dimension_semantics = [#tpu.dimension_semantics<parallel>], iteration_bounds = array<i64: 1>, scalar_prefetch = 0 : i64, scratch_operands = 0 : i64, tpu.core_type = #tpu.core_type<tc>, window_params = [{transform_indices = @transform_0, window_bounds = array<i64: 300, 13>}, {pipeline_mode = #tpu.pipeline_mode<synchronous>, transform_indices = @transform_1, window_bounds = array<i64: 64, 13>}, {pipeline_mode = #tpu.pipeline_mode<synchronous>, transform_indices = @transform_2, window_bounds = array<i64: 64, 1>}, {pipeline_mode = #tpu.pipeline_mode<synchronous>, transform_indices = @transform_3, window_bounds = array<i64: 32, 64>}, {pipeline_mode = #tpu.pipeline_mode<synchronous>, transform_indices = @transform_4, window_bounds = array<i64: 32, 1>}, {pipeline_mode = #tpu.pipeline_mode<synchronous>, transform_indices = @transform_5, window_bounds = array<i64: 1, 32>}, {pipeline_mode = #tpu.pipeline_mode<synchronous>, transform_indices = @transform_6, window_bounds = array<i64: 1, 1>}, {transform_indices = @transform_7, window_bounds = array<i64: 1, 300>}]} {
    %c0 = arith.constant 0 : index
    %c0_0 = arith.constant 0 : index
    %0 = vector.load %arg2[%c0, %c0_0] : memref<64x13xf32, #tpu.memory_space<vmem>>, vector<64x13xf32>
    %c0_1 = arith.constant 0 : index
    %c0_2 = arith.constant 0 : index
    %1 = vector.load %arg1[%c0_1, %c0_2] : memref<300x13xf32, #tpu.memory_space<vmem>>, vector<300x13xf32>
    %cst = arith.constant dense<0.000000e+00> : vector<64x300xf32>
    %2 = tpu.matmul %0, %1, %cst {dimension_numbers = #tpu.dot_dimension_numbers<[1], [1], [0], [0], [0, 0, 1, 0], [], []>} : vector<64x13xf32>, vector<300x13xf32>, vector<64x300xf32> -> vector<64x300xf32>
    %c0_3 = arith.constant 0 : index
    %c0_4 = arith.constant 0 : index
    %3 = vector.load %arg3[%c0_3, %c0_4] : memref<64x1xf32, #tpu.memory_space<vmem>>, vector<64x1xf32>
    %4 = vector.broadcast %3 : vector<64x1xf32> to vector<64x300xf32>
    %5 = arith.addf %2, %4 : vector<64x300xf32>
    %cst_5 = arith.constant 0.000000e+00 : f32
    %6 = vector.broadcast %cst_5 : f32 to vector<64x300xf32>
    %7 = arith.maximumf %5, %6 : vector<64x300xf32>
    %c0_6 = arith.constant 0 : index
    %c0_7 = arith.constant 0 : index
    %8 = vector.load %arg4[%c0_6, %c0_7] : memref<32x64xf32, #tpu.memory_space<vmem>>, vector<32x64xf32>
    %cst_8 = arith.constant dense<0.000000e+00> : vector<32x300xf32>
    %9 = tpu.matmul %8, %7, %cst_8 {dimension_numbers = #tpu.dot_dimension_numbers<[1], [0], [0], [1], [0, 0, 1, 1], [], []>} : vector<32x64xf32>, vector<64x300xf32>, vector<32x300xf32> -> vector<32x300xf32>
    %c0_9 = arith.constant 0 : index
    %c0_10 = arith.constant 0 : index
    %10 = vector.load %arg5[%c0_9, %c0_10] : memref<32x1xf32, #tpu.memory_space<vmem>>, vector<32x1xf32>
    %11 = vector.broadcast %10 : vector<32x1xf32> to vector<32x300xf32>
    %12 = arith.addf %9, %11 : vector<32x300xf32>
    %cst_11 = arith.constant 0.000000e+00 : f32
    %13 = vector.broadcast %cst_11 : f32 to vector<32x300xf32>
    %14 = arith.maximumf %12, %13 : vector<32x300xf32>
    %c0_12 = arith.constant 0 : index
    %c0_13 = arith.constant 0 : index
    %15 = vector.load %arg6[%c0_12, %c0_13] : memref<1x32xf32, #tpu.memory_space<vmem>>, vector<1x32xf32>
    %cst_14 = arith.constant dense<0.000000e+00> : vector<1x300xf32>
    %16 = tpu.matmul %15, %14, %cst_14 {dimension_numbers = #tpu.dot_dimension_numbers<[1], [0], [0], [1], [0, 0, 1, 1], [], []>} : vector<1x32xf32>, vector<32x300xf32>, vector<1x300xf32> -> vector<1x300xf32>
    %c0_15 = arith.constant 0 : index
    %c0_16 = arith.constant 0 : index
    %17 = vector.load %arg7[%c0_15, %c0_16] : memref<1x1xf32, #tpu.memory_space<vmem>>, vector<1x1xf32>
    %18 = vector.broadcast %17 : vector<1x1xf32> to vector<1x300xf32>
    %19 = arith.addf %16, %18 : vector<1x300xf32>
    %c0_17 = arith.constant 0 : index
    %c0_18 = arith.constant 0 : index
    %20 = vector.load %arg8[%c0_17, %c0_18] : memref<1x300xf32, #tpu.memory_space<vmem>>, vector<1x300xf32>
    tpu.vector_store %arg8[%c0_17, %c0_18], %19 {strides = array<i32>} : memref<1x300xf32, #tpu.memory_space<vmem>>, vector<1x300xf32>,
    return
  }
  func.func @transform_0(%arg0: i32) -> (i32, i32) {
    %c0_i32 = arith.constant 0 : i32
    %c0_i32_0 = arith.constant 0 : i32
    return %arg0, %c0_i32 : i32, i32
  }
  func.func @transform_1(%arg0: i32) -> (i32, i32) {
    %c0_i32 = arith.constant 0 : i32
    %c0_i32_0 = arith.constant 0 : i32
    %c0_i32_1 = arith.constant 0 : i32
    return %c0_i32, %c0_i32_0 : i32, i32
  }
  func.func @transform_2(%arg0: i32) -> (i32, i32) {
    %c0_i32 = arith.constant 0 : i32
    %c0_i32_0 = arith.constant 0 : i32
    %c0_i32_1 = arith.constant 0 : i32
    return %c0_i32, %c0_i32_0 : i32, i32
  }
  func.func @transform_3(%arg0: i32) -> (i32, i32) {
    %c0_i32 = arith.constant 0 : i32
    %c0_i32_0 = arith.constant 0 : i32
    %c0_i32_1 = arith.constant 0 : i32
    return %c0_i32, %c0_i32_0 : i32, i32
  }
  func.func @transform_4(%arg0: i32) -> (i32, i32) {
    %c0_i32 = arith.constant 0 : i32
    %c0_i32_0 = arith.constant 0 : i32
    %c0_i32_1 = arith.constant 0 : i32
    return %c0_i32, %c0_i32_0 : i32, i32
  }
  func.func @transform_5(%arg0: i32) -> (i32, i32) {
    %c0_i32 = arith.constant 0 : i32
    %c0_i32_0 = arith.constant 0 : i32
    %c0_i32_1 = arith.constant 0 : i32
    return %c0_i32, %c0_i32_0 : i32, i32
  }
  func.func @transform_6(%arg0: i32) -> (i32, i32) {
    %c0_i32 = arith.constant 0 : i32
    %c0_i32_0 = arith.constant 0 : i32
    %c0_i32_1 = arith.constant 0 : i32
    return %c0_i32, %c0_i32_0 : i32, i32
  }
  func.func @transform_7(%arg0: i32) -> (i32, i32) {
    %c0_i32 = arith.constant 0 : i32
    %c0_i32_0 = arith.constant 0 : i32
    return %c0_i32, %arg0 : i32, i32
  }
}

</mosaic_0001>

<llo_original>
// kernel: tpu_custom_call.1
$region0: #{tpu_custom_call.1}
  #allocation0 [shape = 'u32[]', space=smem, size = 0x4, offset = 0x4, fixed_abs, tag = 'smem constant byte address 0x4 - core index']
  #allocation1 [shape = 'u32[144,128]{1,0:T(1,128)}', space=vmem, size = 0x12000, scoped, tag = 'internal scratch']
  #allocation2 [shape = 'f32[1,1]{1,0:T(1,128)S(1)}', space=vmem, size = 0x200, scoped, tag = 'scoped memory for tpu_custom_call.1']
  %s0 = inlined_call_operand.vmem [shape: f32[300,13], index: 0, kind: input, shape index: {}]
  %s1 = inlined_call_operand.vmem [shape: f32[64,13], index: 1, kind: input, shape index: {}]
  %s2 = inlined_call_operand.vmem [shape: f32[64,1], index: 2, kind: input, shape index: {}]
  %s3 = inlined_call_operand.vmem [shape: f32[32,64], index: 3, kind: input, shape index: {}]
  %s4 = inlined_call_operand.vmem [shape: f32[32,1], index: 4, kind: input, shape index: {}]
  %s5 = inlined_call_operand.vmem [shape: f32[1,32], index: 5, kind: input, shape index: {}]
  %s6 = inlined_call_operand.<no memory space> [shape: f32[1,1], index: 6, kind: input, shape index: {}]
  %s7 = inlined_call_operand.hbm [shape: f32[1,300], index: 7, kind: output, shape index: {}]
  %s8 = sld [smem:[#allocation0]]
  $region38: #{tpu_custom_call.1} parent=0
    _
  %s10 = ssub.s32 1, %s8
  %s11 = scalar_select 0, %s10, %s8
  %v12 = vstv %s6
  %13 = vst [vmem:[#allocation2] sm:$0x1] %v12
  $region1: #{tpu_custom_call.1} parent=0
    #allocation3 [shape = 'u8[1536]{0}', space=vmem, size = 0x800, scoped, tag = 'output window, operand 0, single buffered']
    #allocation4 [shape = 's32[1]{0}', space=sflag, size = 0x4, scoped, tag = 'scoped memory for tpu_custom_call.1']
    %14 = vsyncpa [#allocation4], 0
    // Predicated region
    $region2: #{tpu_custom_call.1} parent=1 // pred_check
      _
    $region3: #{tpu_custom_call.1} parent=1 // pred_check_branch
      %16 = sbr.rel (0) target = $region5
    $region4: #{tpu_custom_call.1} parent=1 // pred_region
      _
    $region5: #{tpu_custom_call.1} parent=1 // pred_fallthru
      _
    // Predicated region
    $region6: #{tpu_custom_call.1} parent=1 // pred_check
      _
    $region7: #{tpu_custom_call.1} parent=1 // pred_check_branch
      %18 = sbr.rel (0) target = $region9
    $region8: #{tpu_custom_call.1} parent=1 // pred_region
      _
    $region9: #{tpu_custom_call.1} parent=1 // pred_fallthru
      _
    // Predicated region
    $region10: #{tpu_custom_call.1} parent=1 // pred_check
      _
    $region11: #{tpu_custom_call.1} parent=1 // pred_check_branch
      %20 = sbr.rel (0) target = $region13
    $region12: #{tpu_custom_call.1} parent=1 // pred_region
      _
    $region13: #{tpu_custom_call.1} parent=1 // pred_fallthru
      _
    // Predicated region
    $region14: #{tpu_custom_call.1} parent=1 // pred_check
      _
    $region15: #{tpu_custom_call.1} parent=1 // pred_check_branch
      %22 = sbr.rel (0) target = $region17
    $region16: #{tpu_custom_call.1} parent=1 // pred_region
      _
    $region17: #{tpu_custom_call.1} parent=1 // pred_fallthru
      _
    // Predicated region
    $region18: #{tpu_custom_call.1} parent=1 // pred_check
      _
    $region19: #{tpu_custom_call.1} parent=1 // pred_check_branch
      %24 = sbr.rel (0) target = $region21
    $region20: #{tpu_custom_call.1} parent=1 // pred_region
      _
    $region21: #{tpu_custom_call.1} parent=1 // pred_fallthru
      _
    // Predicated region
    $region22: #{tpu_custom_call.1} parent=1 // pred_check
      _
    $region23: #{tpu_custom_call.1} parent=1 // pred_check_branch
      %26 = sbr.rel (0) target = $region25
    $region24: #{tpu_custom_call.1} parent=1 // pred_region
      _
    $region25: #{tpu_custom_call.1} parent=1 // pred_fallthru
      _
    // Predicated region
    $region26: #{tpu_custom_call.1} parent=1 // pred_check
      _
    $region27: #{tpu_custom_call.1} parent=1 // pred_check_branch
      %28 = sbr.rel (0) target = $region29
    $region28: #{tpu_custom_call.1} parent=1 // pred_region
      _
    $region29: #{tpu_custom_call.1} parent=1 // pred_fallthru
      _
    %v29 = vld [vmem:[%s1] sm:$0xff]
    %v30 = vld [vmem:[%s1 + $0x8] sm:$0xff]
    %v31 = vld [vmem:[%s1 + $0x10] sm:$0xff]
    %v32 = vld [vmem:[%s1 + $0x18] sm:$0xff]
    %v33 = vld [vmem:[%s1 + $0x20] sm:$0xff]
    %v34 = vld [vmem:[%s1 + $0x28] sm:$0xff]
    %v35 = vld [vmem:[%s1 + $0x30] sm:$0xff]
    %v36 = vld [vmem:[%s1 + $0x38] sm:$0xff]
    %v37 = vld [vmem:[%s0] sm:$0xff]
    %v38 = vld [vmem:[%s0 + $0x8] sm:$0xff]
    %v39 = vld [vmem:[%s0 + $0x10] sm:$0xff]
    %v40 = vld [vmem:[%s0 + $0x18] sm:$0xff]
    %v41 = vld [vmem:[%s0 + $0x20] sm:$0xff]
    %v42 = vld [vmem:[%s0 + $0x28] sm:$0xff]
    %v43 = vld [vmem:[%s0 + $0x30] sm:$0xff]
    %v44 = vld [vmem:[%s0 + $0x38] sm:$0xff]
    %v45 = vld [vmem:[%s0 + $0x40] sm:$0xff]
    %v46 = vld [vmem:[%s0 + $0x48] sm:$0xff]
    %v47 = vld [vmem:[%s0 + $0x50] sm:$0xff]
    %v48 = vld [vmem:[%s0 + $0x58] sm:$0xff]
    %v49 = vld [vmem:[%s0 + $0x60] sm:$0xff]
    %v50 = vld [vmem:[%s0 + $0x68] sm:$0xff]
    %v51 = vld [vmem:[%s0 + $0x70] sm:$0xff]
    %v52 = vld [vmem:[%s0 + $0x78] sm:$0xff]
    %v53 = vld [vmem:[%s0 + $0x80] sm:$0xff]
    %v54 = vld [vmem:[%s0 + $0x88] sm:$0xff]
    %v55 = vld [vmem:[%s0 + $0x90] sm:$0xff]
    %v56 = vld [vmem:[%s0 + $0x98] sm:$0xff]
    %v57 = vld [vmem:[%s0 + $0xa0] sm:$0xff]
    %v58 = vld [vmem:[%s0 + $0xa8] sm:$0xff]
    %v59 = vld [vmem:[%s0 + $0xb0] sm:$0xff]
    %v60 = vld [vmem:[%s0 + $0xb8] sm:$0xff]
    %v61 = vld [vmem:[%s0 + $0xc0] sm:$0xff]
    %v62 = vld [vmem:[%s0 + $0xc8] sm:$0xff]
    %v63 = vld [vmem:[%s0 + $0xd0] sm:$0xff]
    %v64 = vld [vmem:[%s0 + $0xd8] sm:$0xff]
    %v65 = vld [vmem:[%s0 + $0xe0] sm:$0xff]
    %v66 = vld [vmem:[%s0 + $0xe8] sm:$0xff]
    %v67 = vld [vmem:[%s0 + $0xf0] sm:$0xff]
    %v68 = vld [vmem:[%s0 + $0xf8] sm:$0xff]
    %v69 = vld [vmem:[%s0 + $0x100] sm:$0xff]
    %v70 = vld [vmem:[%s0 + $0x108] sm:$0xff]
    %v71 = vld [vmem:[%s0 + $0x110] sm:$0xff]
    %v72 = vld [vmem:[%s0 + $0x118] sm:$0xff]
    %v73 = vld [vmem:[%s0 + $0x120] sm:$0xff]
    %v74 = vld [vmem:[%s0 + $0x128] sm:$0xf]
    %v75 = vld [vmem:[%s2] sm:$0xff]
    %v76 = vld [vmem:[%s2 + $0x8] sm:$0xff]
    %v77 = vld [vmem:[%s2 + $0x10] sm:$0xff]
    %v78 = vld [vmem:[%s2 + $0x18] sm:$0xff]
    %v79 = vld [vmem:[%s2 + $0x20] sm:$0xff]
    %v80 = vld [vmem:[%s2 + $0x28] sm:$0xff]
    %v81 = vld [vmem:[%s2 + $0x30] sm:$0xff]
    %v82 = vld [vmem:[%s2 + $0x38] sm:$0xff]
    %84 = vset.pattern.permute.xlu0 0
    %85 = vperm.xlu0 %84, %v75
    %v86 = vpop.permute.xlu0 %85
    %89 = vset.pattern.permute.xlu0 0
    %90 = vperm.xlu0 %89, %v76
    %v91 = vpop.permute.xlu0 %90
    %94 = vset.pattern.permute.xlu0 0
    %95 = vperm.xlu0 %94, %v77
    %v96 = vpop.permute.xlu0 %95
    %99 = vset.pattern.permute.xlu0 0
    %100 = vperm.xlu0 %99, %v78
    %v101 = vpop.permute.xlu0 %100
    %104 = vset.pattern.permute.xlu0 0
    %105 = vperm.xlu0 %104, %v79
    %v106 = vpop.permute.xlu0 %105
    %109 = vset.pattern.permute.xlu0 0
    %110 = vperm.xlu0 %109, %v80
    %v111 = vpop.permute.xlu0 %110
    %114 = vset.pattern.permute.xlu0 0
    %115 = vperm.xlu0 %114, %v81
    %v116 = vpop.permute.xlu0 %115
    %119 = vset.pattern.permute.xlu0 0
    %120 = vperm.xlu0 %119, %v82
    %v121 = vpop.permute.xlu0 %120
    %vm123 = vcmask 105472
    %v125 = vsel %vm123, %v29, 0
    %v128 = vsel %vm123, %v30, 0
    %v131 = vsel %vm123, %v31, 0
    %v134 = vsel %vm123, %v32, 0
    %v137 = vsel %vm123, %v33, 0
    %v140 = vsel %vm123, %v34, 0
    %v143 = vsel %vm123, %v35, 0
    %v146 = vsel %vm123, %v36, 0
    %v149 = vsel %vm123, %v37, 0
    %v152 = vsel %vm123, %v38, 0
    %v155 = vsel %vm123, %v39, 0
    %v158 = vsel %vm123, %v40, 0
    %v161 = vsel %vm123, %v41, 0
    %v164 = vsel %vm123, %v42, 0
    %v167 = vsel %vm123, %v43, 0
    %v170 = vsel %vm123, %v44, 0
    %v173 = vsel %vm123, %v45, 0
    %v176 = vsel %vm123, %v46, 0
    %v179 = vsel %vm123, %v47, 0
    %v182 = vsel %vm123, %v48, 0
    %v185 = vsel %vm123, %v49, 0
    %v188 = vsel %vm123, %v50, 0
    %v191 = vsel %vm123, %v51, 0
    %v194 = vsel %vm123, %v52, 0
    %v197 = vsel %vm123, %v53, 0
    %v200 = vsel %vm123, %v54, 0
    %v203 = vsel %vm123, %v55, 0
    %v206 = vsel %vm123, %v56, 0
    %v209 = vsel %vm123, %v57, 0
    %v212 = vsel %vm123, %v58, 0
    %v215 = vsel %vm123, %v59, 0
    %v218 = vsel %vm123, %v60, 0
    %v221 = vsel %vm123, %v61, 0
    %v224 = vsel %vm123, %v62, 0
    %v227 = vsel %vm123, %v63, 0
    %v230 = vsel %vm123, %v64, 0
    %v233 = vsel %vm123, %v65, 0
    %v236 = vsel %vm123, %v66, 0
    %v239 = vsel %vm123, %v67, 0
    %v242 = vsel %vm123, %v68, 0
    %v245 = vsel %vm123, %v69, 0
    %v248 = vsel %vm123, %v70, 0
    %v251 = vsel %vm123, %v71, 0
    %v254 = vsel %vm123, %v72, 0
    %v257 = vsel %vm123, %v73, 0
    %v260 = vsel %vm123, %v74, 0
    %262 = vmatprep.subr.mxu0 0.0
    %263 = vmatpush1.xpose.msra.mxu0 %v149
    %264 = vmatprep.subr.mxu0 0.0
    %265 = vmatpush1.xpose.msra.mxu0 %v152
    %266 = vmatprep.subr.mxu0 0.0
    %267 = vmatpush1.xpose.msra.mxu0 %v155
    %268 = vmatprep.subr.mxu0 0.0
    %269 = vmatpush1.xpose.msra.mxu0 %v158
    %270 = vmatprep.subr.mxu0 0.0
    %271 = vmatpush1.xpose.msra.mxu0 %v161
    %272 = vmatprep.subr.mxu0 0.0
    %273 = vmatpush1.xpose.msra.mxu0 %v164
    %274 = vmatprep.subr.mxu0 0.0
    %275 = vmatpush1.xpose.msra.mxu0 %v167
    %276 = vmatprep.subr.mxu0 0.0
    %277 = vmatpush1.xpose.msra.mxu0 %v170
    %278 = vmatprep.subr.mxu0 0.0
    %279 = vmatpush1.xpose.msra.mxu0 %v173
    %280 = vmatprep.subr.mxu0 0.0
    %281 = vmatpush1.xpose.msra.mxu0 %v176
    %282 = vmatprep.subr.mxu0 0.0
    %283 = vmatpush1.xpose.msra.mxu0 %v179
    %284 = vmatprep.subr.mxu0 0.0
    %285 = vmatpush1.xpose.msra.mxu0 %v182
    %286 = vmatprep.subr.mxu0 0.0
    %287 = vmatpush1.xpose.msra.mxu0 %v185
    %288 = vmatprep.subr.mxu0 0.0
    %289 = vmatpush1.xpose.msra.mxu0 %v188
    %290 = vmatprep.subr.mxu0 0.0
    %291 = vmatpush1.xpose.msra.mxu0 %v191
    %292 = vmatprep.subr.mxu0 0.0
    %293 = vmatpush1.xpose.msra.mxu0 %v194
    %294 = vmatprep.subr.mxu0 0.0
    %295 = vmatpush1.xpose.msra.mxu0 %v197
    %296 = vmatprep.subr.mxu0 0.0
    %297 = vmatpush1.xpose.msra.mxu0 %v200
    %298 = vmatprep.subr.mxu0 0.0
    %299 = vmatpush1.xpose.msra.mxu0 %v203
    %300 = vmatprep.subr.mxu0 0.0
    %301 = vmatpush1.xpose.msra.mxu0 %v206
    %302 = vmatprep.subr.mxu0 0.0
    %303 = vmatpush1.xpose.msra.mxu0 %v209
    %304 = vmatprep.subr.mxu0 0.0
    %305 = vmatpush1.xpose.msra.mxu0 %v212
    %306 = vmatprep.subr.mxu0 0.0
    %307 = vmatpush1.xpose.msra.mxu0 %v215
    %308 = vmatprep.subr.mxu0 0.0
    %309 = vmatpush1.xpose.msra.mxu0 %v218
    %310 = vmatprep.subr.mxu0 0.0
    %311 = vmatpush1.xpose.msra.mxu0 %v221
    %312 = vmatprep.subr.mxu0 0.0
    %313 = vmatpush1.xpose.msra.mxu0 %v224
    %314 = vmatprep.subr.mxu0 0.0
    %315 = vmatpush1.xpose.msra.mxu0 %v227
    %316 = vmatprep.subr.mxu0 0.0
    %317 = vmatpush1.xpose.msra.mxu0 %v230
    %318 = vmatprep.subr.mxu0 0.0
    %319 = vmatpush1.xpose.msra.mxu0 %v233
    %320 = vmatprep.subr.mxu0 0.0
    %321 = vmatpush1.xpose.msra.mxu0 %v236
    %322 = vmatprep.subr.mxu0 0.0
    %323 = vmatpush1.xpose.msra.mxu0 %v239
    %324 = vmatprep.subr.mxu0 0.0
    %325 = vmatpush1.xpose.msra.mxu0 %v242
    %326 = vmatprep.mubr.f32.mxu0 0.0
    %327 = vmatmul.mubr.f32.gmra.mrb[0].mxu0 %v125
    %v328 = vpop.f32.mrb[0].mxu0
    %v329 = vadd.f32 %v86, %v328
    %v330 = vpop.f32.mrb[0].mxu0
    %v331 = vadd.f32 %v86, %v330
    %332 = vmatprep.mubr.f32.mxu0 0.0
    %333 = vmatmul.mubr.f32.gmra.mrb[0].mxu0 %v128
    %v334 = vpop.f32.mrb[0].mxu0
    %v335 = vadd.f32 %v91, %v334
    %v336 = vpop.f32.mrb[0].mxu0
    %v337 = vadd.f32 %v91, %v336
    %338 = vmatprep.mubr.f32.mxu0 0.0
    %339 = vmatmul.mubr.f32.gmra.mrb[0].mxu0 %v131
    %v340 = vpop.f32.mrb[0].mxu0
    %v341 = vadd.f32 %v96, %v340
    %v342 = vpop.f32.mrb[0].mxu0
    %v343 = vadd.f32 %v96, %v342
    %344 = vmatprep.mubr.f32.mxu0 0.0
    %345 = vmatmul.mubr.f32.gmra.mrb[0].mxu0 %v134
    %v346 = vpop.f32.mrb[0].mxu0
    %v347 = vadd.f32 %v101, %v346
    %v348 = vpop.f32.mrb[0].mxu0
    %v349 = vadd.f32 %v101, %v348
    %350 = vmatprep.mubr.f32.mxu0 0.0
    %351 = vmatmul.mubr.f32.gmra.mrb[0].mxu0 %v137
    %v352 = vpop.f32.mrb[0].mxu0
    %v353 = vadd.f32 %v106, %v352
    %v354 = vpop.f32.mrb[0].mxu0
    %v355 = vadd.f32 %v106, %v354
    %356 = vmatprep.mubr.f32.mxu0 0.0
    %357 = vmatmul.mubr.f32.gmra.mrb[0].mxu0 %v140
    %v358 = vpop.f32.mrb[0].mxu0
    %v359 = vadd.f32 %v111, %v358
    %v360 = vpop.f32.mrb[0].mxu0
    %v361 = vadd.f32 %v111, %v360
    %362 = vmatprep.mubr.f32.mxu0 0.0
    %363 = vmatmul.mubr.f32.gmra.mrb[0].mxu0 %v143
    %v364 = vpop.f32.mrb[0].mxu0
    %v365 = vadd.f32 %v116, %v364
    %v366 = vpop.f32.mrb[0].mxu0
    %v367 = vadd.f32 %v116, %v366
    %368 = vmatprep.mubr.f32.mxu0 0.0
    %369 = vmatmul.mubr.f32.gmra.mrb[0].mxu0 %v146
    %v370 = vpop.f32.mrb[0].mxu0
    %v371 = vadd.f32 %v121, %v370
    %v372 = vpop.f32.mrb[0].mxu0
    %v373 = vadd.f32 %v121, %v372
    %374 = vdwg.mxu0
    %375 = vmatprep.subr.mxu0 0.0
    %376 = vmatpush1.xpose.msra.mxu0 %v245
    %377 = vmatprep.subr.mxu0 0.0
    %378 = vmatpush1.xpose.msra.mxu0 %v248
    %379 = vmatprep.subr.mxu0 0.0
    %380 = vmatpush1.xpose.msra.mxu0 %v251
    %381 = vmatprep.subr.mxu0 0.0
    %382 = vmatpush1.xpose.msra.mxu0 %v254
    %383 = vmatprep.subr.mxu0 0.0
    %384 = vmatpush1.xpose.msra.mxu0 %v257
    %385 = vmatprep.subr.mxu0 0.0
    %386 = vmatpush1.xpose.msra.mxu0 %v260
    %387 = vmatprep.subr.mxu0 0.0
    %388 = vmatpush1.xpose.msra.mxu0 0.0
    %389 = vmatprep.subr.mxu0 0.0
    %390 = vmatpush1.xpose.msra.mxu0 0.0
    %391 = vmatprep.subr.mxu0 0.0
    %392 = vmatpush1.xpose.msra.mxu0 0.0
    %393 = vmatprep.subr.mxu0 0.0
    %394 = vmatpush1.xpose.msra.mxu0 0.0
    %395 = vmatprep.subr.mxu0 0.0
    %396 = vmatpush1.xpose.msra.mxu0 0.0
    %397 = vmatprep.subr.mxu0 0.0
    %398 = vmatpush1.xpose.msra.mxu0 0.0
    %399 = vmatprep.subr.mxu0 0.0
    %400 = vmatpush1.xpose.msra.mxu0 0.0
    %401 = vmatprep.subr.mxu0 0.0
    %402 = vmatpush1.xpose.msra.mxu0 0.0
    %403 = vmatprep.subr.mxu0 0.0
    %404 = vmatpush1.xpose.msra.mxu0 0.0
    %405 = vmatprep.subr.mxu0 0.0
    %406 = vmatpush1.xpose.msra.mxu0 0.0
    %407 = vmatprep.subr.mxu0 0.0
    %408 = vmatpush1.xpose.msra.mxu0 0.0
    %409 = vmatprep.subr.mxu0 0.0
    %410 = vmatpush1.xpose.msra.mxu0 0.0
    %411 = vmatprep.subr.mxu0 0.0
    %412 = vmatpush1.xpose.msra.mxu0 0.0
    %413 = vmatprep.subr.mxu0 0.0
    %414 = vmatpush1.xpose.msra.mxu0 0.0
    %415 = vmatprep.subr.mxu0 0.0
    %416 = vmatpush1.xpose.msra.mxu0 0.0
    %417 = vmatprep.subr.mxu0 0.0
    %418 = vmatpush1.xpose.msra.mxu0 0.0
    %419 = vmatprep.subr.mxu0 0.0
    %420 = vmatpush1.xpose.msra.mxu0 0.0
    %421 = vmatprep.subr.mxu0 0.0
    %422 = vmatpush1.xpose.msra.mxu0 0.0
    %423 = vmatprep.subr.mxu0 0.0
    %424 = vmatpush1.xpose.msra.mxu0 0.0
    %425 = vmatprep.subr.mxu0 0.0
    %426 = vmatpush1.xpose.msra.mxu0 0.0
    %427 = vmatprep.subr.mxu0 0.0
    %428 = vmatpush1.xpose.msra.mxu0 0.0
    %429 = vmatprep.subr.mxu0 0.0
    %430 = vmatpush1.xpose.msra.mxu0 0.0
    %431 = vmatprep.subr.mxu0 0.0
    %432 = vmatpush1.xpose.msra.mxu0 0.0
    %433 = vmatprep.subr.mxu0 0.0
    %434 = vmatpush1.xpose.msra.mxu0 0.0
    %435 = vmatprep.subr.mxu0 0.0
    %436 = vmatpush1.xpose.msra.mxu0 0.0
    %437 = vmatprep.subr.mxu0 0.0
    %438 = vmatpush1.xpose.msra.mxu0 0.0
    %439 = vmatprep.mubr.f32.mxu0 0.0
    %440 = vmatmul.mubr.f32.gmra.mrb[0].mxu0 %v125
    %v441 = vpop.f32.mrb[0].mxu0
    %v442 = vadd.f32 %v86, %v441
    %v443 = vpop.f32.mrb[0].mxu0
    %444 = vmatprep.mubr.f32.mxu0 0.0
    %445 = vmatmul.mubr.f32.gmra.mrb[0].mxu0 %v128
    %v446 = vpop.f32.mrb[0].mxu0
    %v447 = vadd.f32 %v91, %v446
    %v448 = vpop.f32.mrb[0].mxu0
    %449 = vmatprep.mubr.f32.mxu0 0.0
    %450 = vmatmul.mubr.f32.gmra.mrb[0].mxu0 %v131
    %v451 = vpop.f32.mrb[0].mxu0
    %v452 = vadd.f32 %v96, %v451
    %v453 = vpop.f32.mrb[0].mxu0
    %454 = vmatprep.mubr.f32.mxu0 0.0
    %455 = vmatmul.mubr.f32.gmra.mrb[0].mxu0 %v134
    %v456 = vpop.f32.mrb[0].mxu0
    %v457 = vadd.f32 %v101, %v456
    %v458 = vpop.f32.mrb[0].mxu0
    %459 = vmatprep.mubr.f32.mxu0 0.0
    %460 = vmatmul.mubr.f32.gmra.mrb[0].mxu0 %v137
    %v461 = vpop.f32.mrb[0].mxu0
    %v462 = vadd.f32 %v106, %v461
    %v463 = vpop.f32.mrb[0].mxu0
    %464 = vmatprep.mubr.f32.mxu0 0.0
    %465 = vmatmul.mubr.f32.gmra.mrb[0].mxu0 %v140
    %v466 = vpop.f32.mrb[0].mxu0
    %v467 = vadd.f32 %v111, %v466
    %v468 = vpop.f32.mrb[0].mxu0
    %469 = vmatprep.mubr.f32.mxu0 0.0
    %470 = vmatmul.mubr.f32.gmra.mrb[0].mxu0 %v143
    %v471 = vpop.f32.mrb[0].mxu0
    %v472 = vadd.f32 %v116, %v471
    %v473 = vpop.f32.mrb[0].mxu0
    %474 = vmatprep.mubr.f32.mxu0 0.0
    %475 = vmatmul.mubr.f32.gmra.mrb[0].mxu0 %v146
    %v476 = vpop.f32.mrb[0].mxu0
    %v477 = vadd.f32 %v121, %v476
    %v478 = vpop.f32.mrb[0].mxu0
    %479 = vdwg.mxu0
    %v480 = vmax.f32 %v329, 0.0
    %v481 = vmax.f32 %v331, 0.0
    %v482 = vmax.f32 %v442, 0.0
    %v483 = vmax.f32 %v335, 0.0
    %v484 = vmax.f32 %v337, 0.0
    %v485 = vmax.f32 %v447, 0.0
    %v486 = vmax.f32 %v341, 0.0
    %v487 = vmax.f32 %v343, 0.0
    %v488 = vmax.f32 %v452, 0.0
    %v489 = vmax.f32 %v347, 0.0
    %v490 = vmax.f32 %v349, 0.0
    %v491 = vmax.f32 %v457, 0.0
    %v492 = vmax.f32 %v353, 0.0
    %v493 = vmax.f32 %v355, 0.0
    %v494 = vmax.f32 %v462, 0.0
    %v495 = vmax.f32 %v359, 0.0
    %v496 = vmax.f32 %v361, 0.0
    %v497 = vmax.f32 %v467, 0.0
    %v498 = vmax.f32 %v365, 0.0
    %v499 = vmax.f32 %v367, 0.0
    %v500 = vmax.f32 %v472, 0.0
    %v501 = vmax.f32 %v371, 0.0
    %v502 = vmax.f32 %v373, 0.0
    %v503 = vmax.f32 %v477, 0.0
    %v504 = vld [vmem:[%s3] sm:$0xff]
    %v505 = vld [vmem:[%s3 + $0x8] sm:$0xff]
    %v506 = vld [vmem:[%s3 + $0x10] sm:$0xff]
    %v507 = vld [vmem:[%s3 + $0x18] sm:$0xff]
    %v508 = vld [vmem:[%s4] sm:$0xff]
    %v509 = vld [vmem:[%s4 + $0x8] sm:$0xff]
    %v510 = vld [vmem:[%s4 + $0x10] sm:$0xff]
    %v511 = vld [vmem:[%s4 + $0x18] sm:$0xff]
    %513 = vset.pattern.permute.xlu0 0
    %514 = vperm.xlu0 %513, %v508
    %v515 = vpop.permute.xlu0 %514
    %518 = vset.pattern.permute.xlu0 0
    %519 = vperm.xlu0 %518, %v509
    %v520 = vpop.permute.xlu0 %519
    %523 = vset.pattern.permute.xlu0 0
    %524 = vperm.xlu0 %523, %v510
    %v525 = vpop.permute.xlu0 %524
    %528 = vset.pattern.permute.xlu0 0
    %529 = vperm.xlu0 %528, %v511
    %v530 = vpop.permute.xlu0 %529
    %vm532 = vcmask 523264
    %v534 = vsel %vm532, %v504, 0
    %v537 = vsel %vm532, %v505, 0
    %v540 = vsel %vm532, %v506, 0
    %v543 = vsel %vm532, %v507, 0
    %545 = vmatprep.subr.mxu0 %v481
    %546 = vmatpush1.msra.mxu0 %v480
    %547 = vmatprep.subr.mxu0 %v484
    %548 = vmatpush1.msra.mxu0 %v483
    %549 = vmatprep.subr.mxu0 %v487
    %550 = vmatpush1.msra.mxu0 %v486
    %551 = vmatprep.subr.mxu0 %v490
    %552 = vmatpush1.msra.mxu0 %v489
    %553 = vmatprep.subr.mxu0 %v493
    %554 = vmatpush1.msra.mxu0 %v492
    %555 = vmatprep.subr.mxu0 %v496
    %556 = vmatpush1.msra.mxu0 %v495
    %557 = vmatprep.subr.mxu0 %v499
    %558 = vmatpush1.msra.mxu0 %v498
    %559 = vmatprep.subr.mxu0 %v502
    %560 = vmatpush1.msra.mxu0 %v501
    %561 = vmatprep.subr.mxu0 0.0
    %562 = vmatpush1.msra.mxu0 0.0
    %563 = vmatprep.subr.mxu0 0.0
    %564 = vmatpush1.msra.mxu0 0.0
    %565 = vmatprep.subr.mxu0 0.0
    %566 = vmatpush1.msra.mxu0 0.0
    %567 = vmatprep.subr.mxu0 0.0
    %568 = vmatpush1.msra.mxu0 0.0
    %569 = vmatprep.subr.mxu0 0.0
    %570 = vmatpush1.msra.mxu0 0.0
    %571 = vmatprep.subr.mxu0 0.0
    %572 = vmatpush1.msra.mxu0 0.0
    %573 = vmatprep.subr.mxu0 0.0
    %574 = vmatpush1.msra.mxu0 0.0
    %575 = vmatprep.subr.mxu0 0.0
    %576 = vmatpush1.msra.mxu0 0.0
    %577 = vmatprep.subr.mxu0 0.0
    %578 = vmatpush1.msra.mxu0 0.0
    %579 = vmatprep.subr.mxu0 0.0
    %580 = vmatpush1.msra.mxu0 0.0
    %581 = vmatprep.subr.mxu0 0.0
    %582 = vmatpush1.msra.mxu0 0.0
    %583 = vmatprep.subr.mxu0 0.0
    %584 = vmatpush1.msra.mxu0 0.0
    %585 = vmatprep.subr.mxu0 0.0
    %586 = vmatpush1.msra.mxu0 0.0
    %587 = vmatprep.subr.mxu0 0.0
    %588 = vmatpush1.msra.mxu0 0.0
    %589 = vmatprep.subr.mxu0 0.0
    %590 = vmatpush1.msra.mxu0 0.0
    %591 = vmatprep.subr.mxu0 0.0
    %592 = vmatpush1.msra.mxu0 0.0
    %593 = vmatprep.subr.mxu0 0.0
    %594 = vmatpush1.msra.mxu0 0.0
    %595 = vmatprep.subr.mxu0 0.0
    %596 = vmatpush1.msra.mxu0 0.0
    %597 = vmatprep.subr.mxu0 0.0
    %598 = vmatpush1.msra.mxu0 0.0
    %599 = vmatprep.subr.mxu0 0.0
    %600 = vmatpush1.msra.mxu0 0.0
    %601 = vmatprep.subr.mxu0 0.0
    %602 = vmatpush1.msra.mxu0 0.0
    %603 = vmatprep.subr.mxu0 0.0
    %604 = vmatpush1.msra.mxu0 0.0
    %605 = vmatprep.subr.mxu0 0.0
    %606 = vmatpush1.msra.mxu0 0.0
    %607 = vmatprep.subr.mxu0 0.0
    %608 = vmatpush1.msra.mxu0 0.0
    %609 = vmatprep.mubr.f32.mxu0 0.0
    %610 = vmatmul.mubr.f32.gmra.mrb[0].mxu0 %v534
    %v611 = vpop.f32.mrb[0].mxu0
    %v612 = vadd.f32 %v515, %v611
    %v613 = vpop.f32.mrb[0].mxu0
    %v614 = vadd.f32 %v515, %v613
    %615 = vmatprep.mubr.f32.mxu0 0.0
    %616 = vmatmul.mubr.f32.gmra.mrb[0].mxu0 %v537
    %v617 = vpop.f32.mrb[0].mxu0
    %v618 = vadd.f32 %v520, %v617
    %v619 = vpop.f32.mrb[0].mxu0
    %v620 = vadd.f32 %v520, %v619
    %621 = vmatprep.mubr.f32.mxu0 0.0
    %622 = vmatmul.mubr.f32.gmra.mrb[0].mxu0 %v540
    %v623 = vpop.f32.mrb[0].mxu0
    %v624 = vadd.f32 %v525, %v623
    %v625 = vpop.f32.mrb[0].mxu0
    %v626 = vadd.f32 %v525, %v625
    %627 = vmatprep.mubr.f32.mxu0 0.0
    %628 = vmatmul.mubr.f32.gmra.mrb[0].mxu0 %v543
    %v629 = vpop.f32.mrb[0].mxu0
    %v630 = vadd.f32 %v530, %v629
    %v631 = vpop.f32.mrb[0].mxu0
    %v632 = vadd.f32 %v530, %v631
    %633 = vdwg.mxu0
    %634 = vmatprep.subr.mxu0 0.0
    %635 = vmatpush1.msra.mxu0 %v482
    %636 = vmatprep.subr.mxu0 0.0
    %637 = vmatpush1.msra.mxu0 %v485
    %638 = vmatprep.subr.mxu0 0.0
    %639 = vmatpush1.msra.mxu0 %v488
    %640 = vmatprep.subr.mxu0 0.0
    %641 = vmatpush1.msra.mxu0 %v491
    %642 = vmatprep.subr.mxu0 0.0
    %643 = vmatpush1.msra.mxu0 %v494
    %644 = vmatprep.subr.mxu0 0.0
    %645 = vmatpush1.msra.mxu0 %v497
    %646 = vmatprep.subr.mxu0 0.0
    %647 = vmatpush1.msra.mxu0 %v500
    %648 = vmatprep.subr.mxu0 0.0
    %649 = vmatpush1.msra.mxu0 %v503
    %650 = vmatprep.subr.mxu0 0.0
    %651 = vmatpush1.msra.mxu0 0.0
    %652 = vmatprep.subr.mxu0 0.0
    %653 = vmatpush1.msra.mxu0 0.0
    %654 = vmatprep.subr.mxu0 0.0
    %655 = vmatpush1.msra.mxu0 0.0
    %656 = vmatprep.subr.mxu0 0.0
    %657 = vmatpush1.msra.mxu0 0.0
    %658 = vmatprep.subr.mxu0 0.0
    %659 = vmatpush1.msra.mxu0 0.0
    %660 = vmatprep.subr.mxu0 0.0
    %661 = vmatpush1.msra.mxu0 0.0
    %662 = vmatprep.subr.mxu0 0.0
    %663 = vmatpush1.msra.mxu0 0.0
    %664 = vmatprep.subr.mxu0 0.0
    %665 = vmatpush1.msra.mxu0 0.0
    %666 = vmatprep.subr.mxu0 0.0
    %667 = vmatpush1.msra.mxu0 0.0
    %668 = vmatprep.subr.mxu0 0.0
    %669 = vmatpush1.msra.mxu0 0.0
    %670 = vmatprep.subr.mxu0 0.0
    %671 = vmatpush1.msra.mxu0 0.0
    %672 = vmatprep.subr.mxu0 0.0
    %673 = vmatpush1.msra.mxu0 0.0
    %674 = vmatprep.subr.mxu0 0.0
    %675 = vmatpush1.msra.mxu0 0.0
    %676 = vmatprep.subr.mxu0 0.0
    %677 = vmatpush1.msra.mxu0 0.0
    %678 = vmatprep.subr.mxu0 0.0
    %679 = vmatpush1.msra.mxu0 0.0
    %680 = vmatprep.subr.mxu0 0.0
    %681 = vmatpush1.msra.mxu0 0.0
    %682 = vmatprep.subr.mxu0 0.0
    %683 = vmatpush1.msra.mxu0 0.0
    %684 = vmatprep.subr.mxu0 0.0
    %685 = vmatpush1.msra.mxu0 0.0
    %686 = vmatprep.subr.mxu0 0.0
    %687 = vmatpush1.msra.mxu0 0.0
    %688 = vmatprep.subr.mxu0 0.0
    %689 = vmatpush1.msra.mxu0 0.0
    %690 = vmatprep.subr.mxu0 0.0
    %691 = vmatpush1.msra.mxu0 0.0
    %692 = vmatprep.subr.mxu0 0.0
    %693 = vmatpush1.msra.mxu0 0.0
    %694 = vmatprep.subr.mxu0 0.0
    %695 = vmatpush1.msra.mxu0 0.0
    %696 = vmatprep.subr.mxu0 0.0
    %697 = vmatpush1.msra.mxu0 0.0
    %698 = vmatprep.mubr.f32.mxu0 0.0
    %699 = vmatmul.mubr.f32.gmra.mrb[0].mxu0 %v534
    %v700 = vpop.f32.mrb[0].mxu0
    %v701 = vadd.f32 %v515, %v700
    %v702 = vpop.f32.mrb[0].mxu0
    %703 = vmatprep.mubr.f32.mxu0 0.0
    %704 = vmatmul.mubr.f32.gmra.mrb[0].mxu0 %v537
    %v705 = vpop.f32.mrb[0].mxu0
    %v706 = vadd.f32 %v520, %v705
    %v707 = vpop.f32.mrb[0].mxu0
    %708 = vmatprep.mubr.f32.mxu0 0.0
    %709 = vmatmul.mubr.f32.gmra.mrb[0].mxu0 %v540
    %v710 = vpop.f32.mrb[0].mxu0
    %v711 = vadd.f32 %v525, %v710
    %v712 = vpop.f32.mrb[0].mxu0
    %713 = vmatprep.mubr.f32.mxu0 0.0
    %714 = vmatmul.mubr.f32.gmra.mrb[0].mxu0 %v543
    %v715 = vpop.f32.mrb[0].mxu0
    %v716 = vadd.f32 %v530, %v715
    %v717 = vpop.f32.mrb[0].mxu0
    %718 = vdwg.mxu0
    %v719 = vmax.f32 %v612, 0.0
    %v720 = vmax.f32 %v614, 0.0
    %v721 = vmax.f32 %v701, 0.0
    %v722 = vmax.f32 %v618, 0.0
    %v723 = vmax.f32 %v620, 0.0
    %v724 = vmax.f32 %v706, 0.0
    %v725 = vmax.f32 %v624, 0.0
    %v726 = vmax.f32 %v626, 0.0
    %v727 = vmax.f32 %v711, 0.0
    %v728 = vmax.f32 %v630, 0.0
    %v729 = vmax.f32 %v632, 0.0
    %v730 = vmax.f32 %v716, 0.0
    %v731 = vld [vmem:[%s5] sm:$0x1]
    %v732 = vld [vmem:[#allocation2] sm:$0x1]
    %734 = vset.pattern.permute.xlu0 0
    %735 = vperm.xlu0 %734, %v732
    %v736 = vpop.permute.xlu0 %735
    %v738 = vlaneseq
    %v739 = vshrl.u32 %v738, 7
    %v740 = vsub.s32 0, %v739
    %v741 = vrot.slane %v736, %v740
    %vm742 = vcmask 261120
    %v744 = vsel %vm742, %v731, 0
    %746 = vmatprep.subr.mxu0 %v720
    %747 = vmatpush1.msra.mxu0 %v719
    %748 = vmatprep.subr.mxu0 %v723
    %749 = vmatpush1.msra.mxu0 %v722
    %750 = vmatprep.subr.mxu0 %v726
    %751 = vmatpush1.msra.mxu0 %v725
    %752 = vmatprep.subr.mxu0 %v729
    %753 = vmatpush1.msra.mxu0 %v728
    %754 = vmatprep.subr.mxu0 0.0
    %755 = vmatpush1.msra.mxu0 0.0
    %756 = vmatprep.subr.mxu0 0.0
    %757 = vmatpush1.msra.mxu0 0.0
    %758 = vmatprep.subr.mxu0 0.0
    %759 = vmatpush1.msra.mxu0 0.0
    %760 = vmatprep.subr.mxu0 0.0
    %761 = vmatpush1.msra.mxu0 0.0
    %762 = vmatprep.subr.mxu0 0.0
    %763 = vmatpush1.msra.mxu0 0.0
    %764 = vmatprep.subr.mxu0 0.0
    %765 = vmatpush1.msra.mxu0 0.0
    %766 = vmatprep.subr.mxu0 0.0
    %767 = vmatpush1.msra.mxu0 0.0
    %768 = vmatprep.subr.mxu0 0.0
    %769 = vmatpush1.msra.mxu0 0.0
    %770 = vmatprep.subr.mxu0 0.0
    %771 = vmatpush1.msra.mxu0 0.0
    %772 = vmatprep.subr.mxu0 0.0
    %773 = vmatpush1.msra.mxu0 0.0
    %774 = vmatprep.subr.mxu0 0.0
    %775 = vmatpush1.msra.mxu0 0.0
    %776 = vmatprep.subr.mxu0 0.0
    %777 = vmatpush1.msra.mxu0 0.0
    %778 = vmatprep.subr.mxu0 0.0
    %779 = vmatpush1.msra.mxu0 0.0
    %780 = vmatprep.subr.mxu0 0.0
    %781 = vmatpush1.msra.mxu0 0.0
    %782 = vmatprep.subr.mxu0 0.0
    %783 = vmatpush1.msra.mxu0 0.0
    %784 = vmatprep.subr.mxu0 0.0
    %785 = vmatpush1.msra.mxu0 0.0
    %786 = vmatprep.subr.mxu0 0.0
    %787 = vmatpush1.msra.mxu0 0.0
    %788 = vmatprep.subr.mxu0 0.0
    %789 = vmatpush1.msra.mxu0 0.0
    %790 = vmatprep.subr.mxu0 0.0
    %791 = vmatpush1.msra.mxu0 0.0
    %792 = vmatprep.subr.mxu0 0.0
    %793 = vmatpush1.msra.mxu0 0.0
    %794 = vmatprep.subr.mxu0 0.0
    %795 = vmatpush1.msra.mxu0 0.0
    %796 = vmatprep.subr.mxu0 0.0
    %797 = vmatpush1.msra.mxu0 0.0
    %798 = vmatprep.subr.mxu0 0.0
    %799 = vmatpush1.msra.mxu0 0.0
    %800 = vmatprep.subr.mxu0 0.0
    %801 = vmatpush1.msra.mxu0 0.0
    %802 = vmatprep.subr.mxu0 0.0
    %803 = vmatpush1.msra.mxu0 0.0
    %804 = vmatprep.subr.mxu0 0.0
    %805 = vmatpush1.msra.mxu0 0.0
    %806 = vmatprep.subr.mxu0 0.0
    %807 = vmatpush1.msra.mxu0 0.0
    %808 = vmatprep.subr.mxu0 0.0
    %809 = vmatpush1.msra.mxu0 0.0
    %810 = vmatprep.mubr.f32.mxu0 0.0
    %811 = vmatmul.mubr.f32.gmra.mrb[0].mxu0 %v744
    %v812 = vpop.f32.mrb[0].mxu0
    %v813 = vadd.f32 %v741, %v812
    %v814 = vpop.f32.mrb[0].mxu0
    %v815 = vadd.f32 %v741, %v814
    %816 = vdwg.mxu0
    %817 = vmatprep.subr.mxu0 0.0
    %818 = vmatpush1.msra.mxu0 %v721
    %819 = vmatprep.subr.mxu0 0.0
    %820 = vmatpush1.msra.mxu0 %v724
    %821 = vmatprep.subr.mxu0 0.0
    %822 = vmatpush1.msra.mxu0 %v727
    %823 = vmatprep.subr.mxu0 0.0
    %824 = vmatpush1.msra.mxu0 %v730
    %825 = vmatprep.subr.mxu0 0.0
    %826 = vmatpush1.msra.mxu0 0.0
    %827 = vmatprep.subr.mxu0 0.0
    %828 = vmatpush1.msra.mxu0 0.0
    %829 = vmatprep.subr.mxu0 0.0
    %830 = vmatpush1.msra.mxu0 0.0
    %831 = vmatprep.subr.mxu0 0.0
    %832 = vmatpush1.msra.mxu0 0.0
    %833 = vmatprep.subr.mxu0 0.0
    %834 = vmatpush1.msra.mxu0 0.0
    %835 = vmatprep.subr.mxu0 0.0
    %836 = vmatpush1.msra.mxu0 0.0
    %837 = vmatprep.subr.mxu0 0.0
    %838 = vmatpush1.msra.mxu0 0.0
    %839 = vmatprep.subr.mxu0 0.0
    %840 = vmatpush1.msra.mxu0 0.0
    %841 = vmatprep.subr.mxu0 0.0
    %842 = vmatpush1.msra.mxu0 0.0
    %843 = vmatprep.subr.mxu0 0.0
    %844 = vmatpush1.msra.mxu0 0.0
    %845 = vmatprep.subr.mxu0 0.0
    %846 = vmatpush1.msra.mxu0 0.0
    %847 = vmatprep.subr.mxu0 0.0
    %848 = vmatpush1.msra.mxu0 0.0
    %849 = vmatprep.subr.mxu0 0.0
    %850 = vmatpush1.msra.mxu0 0.0
    %851 = vmatprep.subr.mxu0 0.0
    %852 = vmatpush1.msra.mxu0 0.0
    %853 = vmatprep.subr.mxu0 0.0
    %854 = vmatpush1.msra.mxu0 0.0
    %855 = vmatprep.subr.mxu0 0.0
    %856 = vmatpush1.msra.mxu0 0.0
    %857 = vmatprep.subr.mxu0 0.0
    %858 = vmatpush1.msra.mxu0 0.0
    %859 = vmatprep.subr.mxu0 0.0
    %860 = vmatpush1.msra.mxu0 0.0
    %861 = vmatprep.subr.mxu0 0.0
    %862 = vmatpush1.msra.mxu0 0.0
    %863 = vmatprep.subr.mxu0 0.0
    %864 = vmatpush1.msra.mxu0 0.0
    %865 = vmatprep.subr.mxu0 0.0
    %866 = vmatpush1.msra.mxu0 0.0
    %867 = vmatprep.subr.mxu0 0.0
    %868 = vmatpush1.msra.mxu0 0.0
    %869 = vmatprep.subr.mxu0 0.0
    %870 = vmatpush1.msra.mxu0 0.0
    %871 = vmatprep.subr.mxu0 0.0
    %872 = vmatpush1.msra.mxu0 0.0
    %873 = vmatprep.subr.mxu0 0.0
    %874 = vmatpush1.msra.mxu0 0.0
    %875 = vmatprep.subr.mxu0 0.0
    %876 = vmatpush1.msra.mxu0 0.0
    %877 = vmatprep.subr.mxu0 0.0
    %878 = vmatpush1.msra.mxu0 0.0
    %879 = vmatprep.subr.mxu0 0.0
    %880 = vmatpush1.msra.mxu0 0.0
    %881 = vmatprep.mubr.f32.mxu0 0.0
    %882 = vmatmul.mubr.f32.gmra.mrb[0].mxu0 %v744
    %v883 = vpop.f32.mrb[0].mxu0
    %v884 = vadd.f32 %v741, %v883
    %v885 = vpop.f32.mrb[0].mxu0
    %886 = vdwg.mxu0
    %v890 = vcombine.low %v813, %v815
    %v892 = vunpack.c.l.s4 1966171168
    %v893 = vunpack.c.0.s8 %v892
    %v894 = vlaneseq
    %v895 = vshrl.u32 %v894, 7
    %v896 = vsub.s32 %v893, %v895
    %v897 = vrot.slane %v890, %v896
    %v899 = vunpack.c.l.s4 1966171168
    %v900 = vunpack.c.0.s8 %v899
    %v901 = vlaneseq
    %v902 = vshrl.u32 %v901, 7
    %v903 = vsub.s32 %v900, %v902
    %v904 = vrot.slane %v884, %v903
    %v905 = vcombine.low %v897, %v904
    %v907 = vunpack.c.l.s4 1966171168
    %v908 = vunpack.c.0.s8 %v907
    %v909 = vlaneseq
    %v910 = vshrl.u32 %v909, 7
    %v911 = vsub.s32 %v908, %v910
    %v912 = vrot.slane %v905, %v911
    %v914 = vlaneseq
    %vm915 = vcmp.ge.s32.totalorder %v914, 0
    %vm916 = vcmp.lt.s32.totalorder %v914, 300
    %vm917 = vmand %vm915, %vm916
    %918 = vst.msk [vmem:[#allocation3] sm:$0x7] %vm917, %v912
    // Predicated region
    $region30: #{tpu_custom_call.1} parent=1 // pred_check
      _
    $region31: #{tpu_custom_call.1} parent=1 // pred_check_branch
      %920 = sbr.rel (0) target = $region33
    $region32: #{tpu_custom_call.1} parent=1 // pred_region
      %s922 = ssub.s32 48, 48
      %923 = vsyncadd [#allocation4], %s922
      %s925 = sshll.u32 [#allocation3], 4
      %s926 = int_to_ptr.vmem [resolvable:$true] %s925
      %928 = dma.vmem_to_hbm [thread:$0]  %s926, 48, %s7, [#allocation4]
    $region33: #{tpu_custom_call.1} parent=1 // pred_fallthru
      _
    // Predicated region
    $region34: #{tpu_custom_call.1} parent=1 // pred_check
      _
    $region35: #{tpu_custom_call.1} parent=1 // pred_check_branch
      %930 = sbr.rel (0) target = $region37
    $region36: #{tpu_custom_call.1} parent=1 // pred_region
      %931 = dma.done [#allocation4], 48
    $region37: #{tpu_custom_call.1} parent=1 // pred_fallthru
      _
    %932 = vsyncpa [#allocation4], 1

</llo_original>
